<compile_context>
chip_gen: v5e
topology: v5e:2x2
jax: 0.10.0
libtpu: 0.0.40
codegen_flags: <defaults>
</compile_context>

<pallas_src>
import functools

import jax
import jax.numpy as jnp
from jax.experimental import pallas as pl
from jax.experimental.pallas import tpu as pltpu


def _round_up(x, m):
    return ((x + m - 1) // m) * m


def _sublane(dtype):
    """Dtype-specific sublane multiple (packed rows per 32-bit sublane)."""
    return {4: 8, 2: 16, 1: 32}[jnp.dtype(dtype).itemsize]


def _vmem_capacity_bytes():
    try:
        return int(pltpu.get_tpu_info().vmem_capacity_bytes)
    except Exception:
        return 64 << 20                     # conservative (v7x per-TC VMEM)


def _tile_defaults():
    """Generation-aware default tile caps (big tiles -> MXU-bound roofline)."""
    cap = _vmem_capacity_bytes()
    if cap >= (100 << 20):                  # v5e / v6e: 128 MiB physical VMEM
        return 1024, 2048, 512, cap
    return 512, 1024, 512, cap              # v7x: 64 MiB per-TC VMEM


def _pick_tile(dim, t_max):
    """Lane-major tile: prefer multiples of 256 (v6e/v7x MXU width), then 128,
    that exactly divide `dim`; otherwise fall back to the full dim."""
    if dim < 128 or dim % 128 != 0:
        return dim                          # block == full array dim (allowed)
    cap = min(t_max, dim)
    for step in (256, 128):
        t = (cap // step) * step
        while t >= step:
            if dim % t == 0:
                return t
            t -= step
    return dim


def _pick_tm(m, t_max, sub):
    """Row-tile: multiple of the dtype sublane count, never larger than M."""
    if m <= sub:
        return m                            # block == full dim (allowed)
    t = min(t_max, (m // sub) * sub)
    return max(sub, (t // sub) * sub)


def _lora_kernel(x_ref, wt_ref, a_ref, lb_ref, *rest, scaling, has_bias,
                 reuse_xa, tk):
    if has_bias:
        b_ref, o_ref, acc_ref, xa_ref = rest
    else:
        o_ref, acc_ref, xa_ref = rest
        b_ref = None

    j = pl.program_id(1)
    k = pl.program_id(2)
    nk = pl.num_programs(2)

    x = x_ref[...]                                            # (tm, tk)

    # ---- base GEMM: acc += x @ W^T tile (weight pre-transposed -> canonical
    #      (tm,tk)@(tk,tn) MXU form, no in-kernel transpose).
    @pl.when(k == 0)
    def _():
        acc_ref[...] = jnp.zeros_like(acc_ref)

    acc_ref[...] += jnp.dot(x, wt_ref[...], preferred_element_type=jnp.float32)

    # ---- LoRA x @ A (lora_a is fully VMEM-resident; slice the K chunk).
    def _xa_step():
        start = pl.multiple_of(k * tk, tk)
        a_blk = a_ref[pl.ds(start, tk), :]
        xa_ref[...] += jnp.dot(x, a_blk, preferred_element_type=jnp.float32)

    if reuse_xa:
        # Accumulate x@A once per row tile (j == 0) and reuse for every N tile.
        # Requires the j axis to run sequentially ("arbitrary").
        @pl.when(jnp.logical_and(j == 0, k == 0))
        def _():
            xa_ref[...] = jnp.zeros_like(xa_ref)

        @pl.when(j == 0)
        def _():
            _xa_step()
    else:
        # Recompute per (i, j): no cross-j state, so j can be "parallel"
        # (2-TensorCore sharding on v7x when the i grid is 1).
        @pl.when(k == 0)
        def _():
            xa_ref[...] = jnp.zeros_like(xa_ref)

        _xa_step()

    # ---- epilogue on the last K step: bias + (x@A)@B * scaling, write out.
    @pl.when(k == nk - 1)
    def _():
        lora = jnp.dot(xa_ref[...], lb_ref[...].astype(jnp.float32),
                       preferred_element_type=jnp.float32)
        out = acc_ref[...] + lora * scaling
        if has_bias:
            out = out + b_ref[...].astype(jnp.float32)
        o_ref[...] = out.astype(o_ref.dtype)


def lora_linear(x, weight_t, bias, lora_a, lora_b, *, alpha, rank,
                tm=None, tn=None, tk=None):
    """Fused LoRA linear.

    x:        [M, D_in]
    weight_t: [D_in, D_out] -- the frozen nn.Linear weight, transposed ONCE at
              load time (amortized over all forward calls).
    bias:     [D_out] or None
    lora_a:   [D_in, rank]
    lora_b:   [rank, D_out]
    """
    M, D_in = x.shape
    D_in_w, D_out = weight_t.shape
    assert D_in == D_in_w
    scaling = float(alpha) / float(rank)
    has_bias = bias is not None

    # ---- generation-aware tile sizes (lane-dense, MXU-friendly)
    tm_d, tn_d, tk_d, vmem_cap = _tile_defaults()
    sub_x = _sublane(x.dtype)
    tm = _pick_tm(M, tm if tm is not None else tm_d, sub_x)
    tn = _pick_tile(D_out, tn if tn is not None else tn_d)
    tk = _pick_tile(D_in, tk if tk is not None else tk_d)

    # ---- pad rank to the params' sublane multiple (KB-scale, negligible)
    sub_r = _sublane(lora_b.dtype)
    r_pad = max(sub_r, _round_up(rank, sub_r))
    if r_pad != rank:
        lora_a = jnp.pad(lora_a, ((0, 0), (0, r_pad - rank)))
        lora_b = jnp.pad(lora_b, ((0, r_pad - rank), (0, 0)))

    n_i = -(-M // tm)
    n_j = -(-D_out // tn)
    n_k = D_in // tk                       # tk divides D_in by construction
    grid = (n_i, n_j, n_k)

    # Reuse x@A across N tiles when the i grid can keep both TCs busy;
    # otherwise recompute per (i, j) so the j axis can be sharded.
    reuse_xa = n_i >= 2
    dim_sem = ("parallel", "arbitrary" if reuse_xa else "parallel", "arbitrary")

    # ---- VMEM budget: double-buffered inputs/output + f32 scratch + headroom
    def _isz(a):
        return jnp.dtype(a.dtype).itemsize

    out_item = jnp.dtype(x.dtype).itemsize
    need = (2 * tm * tk * _isz(x)
            + 2 * tk * tn * _isz(weight_t)
            + 2 * D_in * r_pad * _isz(lora_a)
            + 2 * r_pad * tn * _isz(lora_b)
            + (2 * tn * _isz(bias) if has_bias else 0)
            + 2 * tm * tn * out_item
            + tm * tn * 4 + tm * r_pad * 4)
    vmem_limit = max(need + (8 << 20), 32 << 20)
    vmem_limit = min(vmem_limit, int(vmem_cap * 0.8))
    vmem_limit = int(max(vmem_limit, need + (2 << 20)))

    xa_passes = 1 if reuse_xa else n_j
    cost = pl.CostEstimate(
        flops=int(2 * M * D_in * D_out
                  + 2 * M * D_in * r_pad * xa_passes
                  + 2 * M * r_pad * D_out),
        transcendentals=0,
        bytes_accessed=int(
            x.size * _isz(x) * n_j                     # x re-streamed per N tile
            + weight_t.size * _isz(weight_t) * n_i     # W re-streamed per M tile
            + lora_a.size * _isz(lora_a)
            + lora_b.size * _isz(lora_b) * n_i
            + (bias.size * _isz(bias) * n_i if has_bias else 0)
            + M * D_out * out_item))

    in_specs = [
        pl.BlockSpec((tm, tk), lambda i, j, k: (i, k)),        # x
        pl.BlockSpec((tk, tn), lambda i, j, k: (k, j)),        # weight_t
        pl.BlockSpec((D_in, r_pad), lambda i, j, k: (0, 0)),   # lora_a (resident)
        pl.BlockSpec((r_pad, tn), lambda i, j, k: (0, j)),     # lora_b
    ]
    operands = [x, weight_t, lora_a, lora_b]
    if has_bias:
        in_specs.append(pl.BlockSpec((1, tn), lambda i, j, k: (0, j)))
        operands.append(bias.reshape(1, D_out))

    kernel = functools.partial(_lora_kernel, scaling=scaling, has_bias=has_bias,
                               reuse_xa=reuse_xa, tk=tk)

    return pl.pallas_call(
        kernel,
        out_shape=jax.ShapeDtypeStruct((M, D_out), x.dtype),
        grid_spec=pltpu.PrefetchScalarGridSpec(
            num_scalar_prefetch=0,
            grid=grid,
            in_specs=in_specs,
            out_specs=pl.BlockSpec((tm, tn), lambda i, j, k: (i, j)),
            scratch_shapes=[
                pltpu.VMEM((tm, tn), jnp.float32),     # base accumulator
                pltpu.VMEM((tm, r_pad), jnp.float32),  # x @ lora_a intermediate
            ],
        ),
        compiler_params=pltpu.CompilerParams(
            dimension_semantics=dim_sem,
            vmem_limit_bytes=vmem_limit),
        cost_estimate=cost,
    )(*operands)


def lora_linear_ref(x, weight_t, bias, lora_a, lora_b, *, alpha, rank):
    scaling = float(alpha) / float(rank)
    xf = x.astype(jnp.float32)
    base = xf @ weight_t.astype(jnp.float32)
    if bias is not None:
        base = base + bias.astype(jnp.float32)
    lora = (xf @ lora_a.astype(jnp.float32)) @ lora_b.astype(jnp.float32) * scaling
    return (base + lora).astype(x.dtype)


if __name__ == "__main__":
    def check(batch, seq, d_in, d_out, rank, alpha, seed, dtype=jnp.float32,
              with_bias=True, tol=2e-4, **tiles):
        key = jax.random.PRNGKey(seed)
        kx, kw, kb, ka, kbb = jax.random.split(key, 5)
        x = jax.random.normal(kx, (batch, seq, d_in)).astype(dtype)
        # Frozen base-layer params (deterministic synthetic init).
        weight = (jax.random.normal(kw, (d_out, d_in)) * 0.1).astype(dtype)
        bias = ((jax.random.normal(kb, (d_out,)) * 0.1).astype(dtype)
                if with_bias else None)
        # LoRA params: kaiming-uniform-like lora_a; the module inits lora_b to
        # zeros, but use small nonzero values so the LoRA path is exercised.
        limit = (6.0 / d_in) ** 0.5
        lora_a = jax.random.uniform(ka, (d_in, rank), minval=-limit,
                                    maxval=limit).astype(dtype)
        lora_b = (jax.random.normal(kbb, (rank, d_out)) * 0.02).astype(dtype)

        # One-time (amortized) transpose of the frozen weight to [D_in, D_out];
        # done at model-load time in practice, not per forward call.
        weight_t = weight.T

        x2d = x.reshape(batch * seq, d_in)        # flatten to [M, D_in] (glue)
        out = lora_linear(x2d, weight_t, bias, lora_a, lora_b,
                          alpha=alpha, rank=rank, **tiles)
        out = jax.block_until_ready(out)
        ref = lora_linear_ref(x2d, weight_t, bias, lora_a, lora_b,
                              alpha=alpha, rank=rank)
        assert out.shape == (batch * seq, d_out)
        assert jnp.allclose(out.astype(jnp.float32), ref.astype(jnp.float32),
                            atol=tol, rtol=tol), f"mismatch (dtype={dtype})"
        _ = out.reshape(batch, seq, d_out)        # reshape back (glue)

    # Small shapes implied by the module: batch=2, seq=8, hidden=32 -> 32, rank=4.
    check(batch=2, seq=8, d_in=32, d_out=32, rank=4, alpha=8, seed=0)

    # Full tiled path: partial last M block (140 % 64 != 0, no jnp.pad of x),
    # K accumulation, N tiling, and x@A reuse across N tiles (n_i >= 2).
    check(batch=2, seq=70, d_in=256, d_out=384, rank=4, alpha=8, seed=1,
          tm=64, tn=128, tk=128)

    # Decode-like shape: single M block, several N blocks -> x@A recomputed per
    # (i, j) pass and the j axis marked "parallel" (v7x 2-TC occupancy).
    check(batch=1, seq=8, d_in=256, d_out=512, rank=4, alpha=8, seed=2,
          tn=128, tk=128)

    # bf16 with no bias: exercises dtype-aware sublane rounding (tm multiple of
    # 16, rank padded to 16) and the bias-free kernel specialization.
    check(batch=2, seq=70, d_in=256, d_out=256, rank=8, alpha=16, seed=3,
          dtype=jnp.bfloat16, with_bias=False, tol=2e-2)

    # TODO(synk): the surrounding Lora wrapper (model surgery over a HF model,
    # cross-entropy training loop, merge_weight) has no kernel-level
    # equivalent; only the LoraLayer forward hot path is implemented here.
    print("KERNEL_OK")
</pallas_src>

<mosaic_0001>
module attributes {stable_mosaic.version = 11 : i64} {
  func.func @_lora_kernel(%arg0: i32, %arg1: i32, %arg2: i32, %arg3: memref<16x32xf32, #tpu.memory_space<vmem>>, %arg4: memref<32x32xf32, #tpu.memory_space<vmem>>, %arg5: memref<32x8xf32, #tpu.memory_space<vmem>>, %arg6: memref<8x32xf32, #tpu.memory_space<vmem>>, %arg7: memref<1x32xf32, #tpu.memory_space<vmem>>, %arg8: memref<16x32xf32, #tpu.memory_space<vmem>>, %arg9: memref<16x32xf32, #tpu.memory_space<vmem>>, %arg10: memref<16x8xf32, #tpu.memory_space<vmem>>) attributes {dimension_semantics = [#tpu.dimension_semantics<parallel>, #tpu.dimension_semantics<parallel>, #tpu.dimension_semantics<arbitrary>], iteration_bounds = array<i64: 1, 1, 1>, scalar_prefetch = 0 : i64, scratch_operands = 2 : i64, tpu.core_type = #tpu.core_type<tc>, window_params = [{transform_indices = @transform_0, window_bounds = array<i64: 16, 32>}, {transform_indices = @transform_1, window_bounds = array<i64: 32, 32>}, {pipeline_mode = #tpu.pipeline_mode<synchronous>, transform_indices = @transform_2, window_bounds = array<i64: 32, 8>}, {transform_indices = @transform_3, window_bounds = array<i64: 8, 32>}, {transform_indices = @transform_4, window_bounds = array<i64: 1, 32>}, {transform_indices = @transform_5, window_bounds = array<i64: 16, 32>}]} {
    %c0 = arith.constant 0 : index
    %c0_0 = arith.constant 0 : index
    %0 = vector.load %arg3[%c0, %c0_0] : memref<16x32xf32, #tpu.memory_space<vmem>>, vector<16x32xf32>
    %c0_i32 = arith.constant 0 : i32
    %1 = arith.cmpi eq, %arg2, %c0_i32 : i32
    %2 = arith.extui %1 : i1 to i32
    %c0_i32_1 = arith.constant 0 : i32
    %3 = arith.cmpi ne, %2, %c0_i32_1 : i32
    scf.if %3 {
      %cst_18 = arith.constant 0.000000e+00 : f32
      %23 = vector.broadcast %cst_18 : f32 to vector<16x32xf32>
      %c0_19 = arith.constant 0 : index
      %c0_20 = arith.constant 0 : index
      %24 = vector.load %arg9[%c0_19, %c0_20] : memref<16x32xf32, #tpu.memory_space<vmem>>, vector<16x32xf32>
      tpu.vector_store %arg9[%c0_19, %c0_20], %23 {strides = array<i32>} : memref<16x32xf32, #tpu.memory_space<vmem>>, vector<16x32xf32>,
    } else {
    }
    %c0_2 = arith.constant 0 : index
    %c0_3 = arith.constant 0 : index
    %4 = vector.load %arg9[%c0_2, %c0_3] : memref<16x32xf32, #tpu.memory_space<vmem>>, vector<16x32xf32>
    %c0_4 = arith.constant 0 : index
    %c0_5 = arith.constant 0 : index
    %5 = vector.load %arg4[%c0_4, %c0_5] : memref<32x32xf32, #tpu.memory_space<vmem>>, vector<32x32xf32>
    %cst = arith.constant dense<0.000000e+00> : vector<16x32xf32>
    %6 = tpu.matmul %0, %5, %cst {dimension_numbers = #tpu.dot_dimension_numbers<[1], [0], [0], [1], [0, 0, 1, 1], [], []>} : vector<16x32xf32>, vector<32x32xf32>, vector<16x32xf32> -> vector<16x32xf32>
    %7 = arith.addf %4, %6 : vector<16x32xf32>
    %c0_6 = arith.constant 0 : index
    %c0_7 = arith.constant 0 : index
    %8 = vector.load %arg9[%c0_6, %c0_7] : memref<16x32xf32, #tpu.memory_space<vmem>>, vector<16x32xf32>
    tpu.vector_store %arg9[%c0_6, %c0_7], %7 {strides = array<i32>} : memref<16x32xf32, #tpu.memory_space<vmem>>, vector<16x32xf32>,
    %c0_i32_8 = arith.constant 0 : i32
    %9 = arith.cmpi eq, %arg2, %c0_i32_8 : i32
    %10 = arith.extui %9 : i1 to i32
    %c0_i32_9 = arith.constant 0 : i32
    %11 = arith.cmpi ne, %10, %c0_i32_9 : i32
    scf.if %11 {
      %cst_18 = arith.constant 0.000000e+00 : f32
      %23 = vector.broadcast %cst_18 : f32 to vector<16x8xf32>
      %c0_19 = arith.constant 0 : index
      %c0_20 = arith.constant 0 : index
      %24 = vector.load %arg10[%c0_19, %c0_20] : memref<16x8xf32, #tpu.memory_space<vmem>>, vector<16x8xf32>
      tpu.vector_store %arg10[%c0_19, %c0_20], %23 {strides = array<i32>} : memref<16x8xf32, #tpu.memory_space<vmem>>, vector<16x8xf32>,
    } else {
    }
    %c32_i32 = arith.constant 32 : i32
    %12 = arith.muli %arg2, %c32_i32 : i32
    %13 = tpu.assume_multiple %12, 32 : i32
    %14 = arith.index_cast %13 : i32 to index
    %c0_10 = arith.constant 0 : index
    %15 = vector.load %arg5[%14, %c0_10] : memref<32x8xf32, #tpu.memory_space<vmem>>, vector<32x8xf32>
    %c0_11 = arith.constant 0 : index
    %c0_12 = arith.constant 0 : index
    %16 = vector.load %arg10[%c0_11, %c0_12] : memref<16x8xf32, #tpu.memory_space<vmem>>, vector<16x8xf32>
    %cst_13 = arith.constant dense<0.000000e+00> : vector<16x8xf32>
    %17 = tpu.matmul %0, %15, %cst_13 {dimension_numbers = #tpu.dot_dimension_numbers<[1], [0], [0], [1], [0, 0, 1, 1], [], []>} : vector<16x32xf32>, vector<32x8xf32>, vector<16x8xf32> -> vector<16x8xf32>
    %18 = arith.addf %16, %17 : vector<16x8xf32>
    %c0_14 = arith.constant 0 : index
    %c0_15 = arith.constant 0 : index
    %19 = vector.load %arg10[%c0_14, %c0_15] : memref<16x8xf32, #tpu.memory_space<vmem>>, vector<16x8xf32>
    tpu.vector_store %arg10[%c0_14, %c0_15], %18 {strides = array<i32>} : memref<16x8xf32, #tpu.memory_space<vmem>>, vector<16x8xf32>,
    %c0_i32_16 = arith.constant 0 : i32
    %20 = arith.cmpi eq, %arg2, %c0_i32_16 : i32
    %21 = arith.extui %20 : i1 to i32
    %c0_i32_17 = arith.constant 0 : i32
    %22 = arith.cmpi ne, %21, %c0_i32_17 : i32
    scf.if %22 {
      %c0_18 = arith.constant 0 : index
      %c0_19 = arith.constant 0 : index
      %23 = vector.load %arg10[%c0_18, %c0_19] : memref<16x8xf32, #tpu.memory_space<vmem>>, vector<16x8xf32>
      %c0_20 = arith.constant 0 : index
      %c0_21 = arith.constant 0 : index
      %24 = vector.load %arg6[%c0_20, %c0_21] : memref<8x32xf32, #tpu.memory_space<vmem>>, vector<8x32xf32>
      %cst_22 = arith.constant dense<0.000000e+00> : vector<16x32xf32>
      %25 = tpu.matmul %23, %24, %cst_22 {dimension_numbers = #tpu.dot_dimension_numbers<[1], [0], [0], [1], [0, 0, 1, 1], [], []>} : vector<16x8xf32>, vector<8x32xf32>, vector<16x32xf32> -> vector<16x32xf32>
      %c0_23 = arith.constant 0 : index
      %c0_24 = arith.constant 0 : index
      %26 = vector.load %arg9[%c0_23, %c0_24] : memref<16x32xf32, #tpu.memory_space<vmem>>, vector<16x32xf32>
      %cst_25 = arith.constant 2.000000e+00 : f32
      %27 = vector.broadcast %cst_25 : f32 to vector<16x32xf32>
      %28 = arith.mulf %25, %27 : vector<16x32xf32>
      %29 = arith.addf %26, %28 : vector<16x32xf32>
      %c0_26 = arith.constant 0 : index
      %c0_27 = arith.constant 0 : index
      %30 = vector.load %arg7[%c0_26, %c0_27] : memref<1x32xf32, #tpu.memory_space<vmem>>, vector<1x32xf32>
      %31 = vector.broadcast %30 : vector<1x32xf32> to vector<16x32xf32>
      %32 = arith.addf %29, %31 : vector<16x32xf32>
      %c0_28 = arith.constant 0 : index
      %c0_29 = arith.constant 0 : index
      %33 = vector.load %arg8[%c0_28, %c0_29] : memref<16x32xf32, #tpu.memory_space<vmem>>, vector<16x32xf32>
      tpu.vector_store %arg8[%c0_28, %c0_29], %32 {strides = array<i32>} : memref<16x32xf32, #tpu.memory_space<vmem>>, vector<16x32xf32>,
    } else {
    }
    return
  }
  func.func @transform_0(%arg0: i32, %arg1: i32, %arg2: i32) -> (i32, i32) {
    %c0_i32 = arith.constant 0 : i32
    return %arg0, %arg2 : i32, i32
  }
  func.func @transform_1(%arg0: i32, %arg1: i32, %arg2: i32) -> (i32, i32) {
    %c0_i32 = arith.constant 0 : i32
    return %arg2, %arg1 : i32, i32
  }
  func.func @transform_2(%arg0: i32, %arg1: i32, %arg2: i32) -> (i32, i32) {
    %c0_i32 = arith.constant 0 : i32
    %c0_i32_0 = arith.constant 0 : i32
    %c0_i32_1 = arith.constant 0 : i32
    return %c0_i32, %c0_i32_0 : i32, i32
  }
  func.func @transform_3(%arg0: i32, %arg1: i32, %arg2: i32) -> (i32, i32) {
    %c0_i32 = arith.constant 0 : i32
    %c0_i32_0 = arith.constant 0 : i32
    return %c0_i32, %arg1 : i32, i32
  }
  func.func @transform_4(%arg0: i32, %arg1: i32, %arg2: i32) -> (i32, i32) {
    %c0_i32 = arith.constant 0 : i32
    %c0_i32_0 = arith.constant 0 : i32
    return %c0_i32, %arg1 : i32, i32
  }
  func.func @transform_5(%arg0: i32, %arg1: i32, %arg2: i32) -> (i32, i32) {
    %c0_i32 = arith.constant 0 : i32
    return %arg0, %arg1 : i32, i32
  }
}

</mosaic_0001>

<llo_original>
// kernel: tpu_custom_call.1
$region0: #{tpu_custom_call.1}
  #allocation0 [shape = 'u32[]', space=smem, size = 0x4, offset = 0x4, fixed_abs, tag = 'smem constant byte address 0x4 - core index']
  #allocation1 [shape = 'u32[72,128]{1,0:T(1,128)}', space=vmem, size = 0x9000, scoped, tag = 'internal scratch']
  #allocation2 [shape = 'f32[16,32]{1,0:T(8,128)}', space=vmem, size = 0x2000, scoped, tag = 'scratch operand']
  #allocation3 [shape = 'f32[16,8]{1,0:T(8,128)}', space=vmem, size = 0x2000, scoped, tag = 'scratch operand']
  %s0 = inlined_call_operand.hbm [shape: f32[16,32], index: 0, kind: input, shape index: {}]
  %s1 = inlined_call_operand.vmem [shape: f32[32,32], index: 1, kind: input, shape index: {}]
  %s2 = inlined_call_operand.vmem [shape: f32[32,8], index: 2, kind: input, shape index: {}]
  %s3 = inlined_call_operand.vmem [shape: f32[8,32], index: 3, kind: input, shape index: {}]
  %s4 = inlined_call_operand.vmem [shape: f32[1,32], index: 4, kind: input, shape index: {}]
  %s5 = inlined_call_operand.hbm [shape: f32[16,32], index: 5, kind: output, shape index: {}]
  %s6 = sld [smem:[#allocation0]]
  $region46: #{tpu_custom_call.1} parent=0
    _
  %s8 = ssub.s32 1, %s6
  %s9 = scalar_select 0, %s8, %s6
  $region1: #{tpu_custom_call.1} parent=0
    #allocation4 [shape = 'u8[8192]{0}', space=vmem, size = 0x2000, scoped, tag = 'input window, operand 0, single buffered']
    #allocation5 [shape = 's32[1]{0}', space=sflag, size = 0x4, scoped, tag = 'scoped memory for tpu_custom_call.1']
    #allocation6 [shape = 's32[1]{0}', space=sflag, size = 0x4, scoped, tag = 'scoped memory for tpu_custom_call.1']
    #allocation7 [shape = 'u8[8192]{0}', space=vmem, size = 0x2000, scoped, tag = 'output window, operand 0, single buffered']
    %10 = vsyncpa [#allocation5], 0
    %11 = vsyncpa [#allocation6], 0
    // Predicated region
    $region2: #{tpu_custom_call.1} parent=1 // pred_check
      _
    $region3: #{tpu_custom_call.1} parent=1 // pred_check_branch
      %13 = sbr.rel (0) target = $region5
    $region4: #{tpu_custom_call.1} parent=1 // pred_region
      %15 = vsyncadd [#allocation5], 0
      %s16 = sshll.u32 %s0, 4
      %s17 = int_to_ptr.hbm [resolvable:$true] %s16
      %s18 = sshll.u32 [#allocation4], 4
      %s19 = int_to_ptr.vmem [resolvable:$true] %s18
      %24 = dma.hbm_to_vmem [thread:$0]  %s17, 256, %s19, [#allocation5], 128, 128, 8
    $region5: #{tpu_custom_call.1} parent=1 // pred_fallthru
      _
    // Predicated region
    $region6: #{tpu_custom_call.1} parent=1 // pred_check
      _
    $region7: #{tpu_custom_call.1} parent=1 // pred_check_branch
      %26 = sbr.rel (0) target = $region9
    $region8: #{tpu_custom_call.1} parent=1 // pred_region
      _
    $region9: #{tpu_custom_call.1} parent=1 // pred_fallthru
      _
    // Predicated region
    $region10: #{tpu_custom_call.1} parent=1 // pred_check
      _
    $region11: #{tpu_custom_call.1} parent=1 // pred_check_branch
      %28 = sbr.rel (0) target = $region13
    $region12: #{tpu_custom_call.1} parent=1 // pred_region
      _
    $region13: #{tpu_custom_call.1} parent=1 // pred_fallthru
      _
    // Predicated region
    $region14: #{tpu_custom_call.1} parent=1 // pred_check
      _
    $region15: #{tpu_custom_call.1} parent=1 // pred_check_branch
      %30 = sbr.rel (0) target = $region17
    $region16: #{tpu_custom_call.1} parent=1 // pred_region
      _
    $region17: #{tpu_custom_call.1} parent=1 // pred_fallthru
      _
    // Predicated region
    $region18: #{tpu_custom_call.1} parent=1 // pred_check
      _
    $region19: #{tpu_custom_call.1} parent=1 // pred_check_branch
      %32 = sbr.rel (0) target = $region21
    $region20: #{tpu_custom_call.1} parent=1 // pred_region
      _
    $region21: #{tpu_custom_call.1} parent=1 // pred_fallthru
      _
    // Predicated region
    $region22: #{tpu_custom_call.1} parent=1 // pred_check
      _
    $region23: #{tpu_custom_call.1} parent=1 // pred_check_branch
      %34 = sbr.rel (0) target = $region25
    $region24: #{tpu_custom_call.1} parent=1 // pred_region
      %36 = dma.done [#allocation5], 256
    $region25: #{tpu_custom_call.1} parent=1 // pred_fallthru
      _
    %v37 = vld [vmem:[#allocation4] sm:$0xff]
    %v38 = vld [vmem:[#allocation4 + $0x8] sm:$0xff]
    %p39 = scmp.eq.s32.totalorder 0, 0
    // Predicated region
    $region26: #{tpu_custom_call.1} parent=1 // pred_check
      %p40 = pneg %p39
    $region27: #{tpu_custom_call.1} parent=1 // pred_check_branch
      %42 = sbr.rel (%p40) target = $region29
    $region28: #{tpu_custom_call.1} parent=1 // pred_region
      %vm43 = vcmask 261120
      %44 = vst.msk [vmem:[#allocation2] sm:$0xff] %vm43, 0.0
      %45 = vst.msk [vmem:[#allocation2 + $0x8] sm:$0xff] %vm43, 0.0
    $region29: #{tpu_custom_call.1} parent=1 // pred_fallthru
      _
    %v46 = vld [vmem:[#allocation2] sm:$0xff]
    %v47 = vld [vmem:[#allocation2 + $0x8] sm:$0xff]
    %v48 = vld [vmem:[%s1] sm:$0xff]
    %v49 = vld [vmem:[%s1 + $0x8] sm:$0xff]
    %v50 = vld [vmem:[%s1 + $0x10] sm:$0xff]
    %v51 = vld [vmem:[%s1 + $0x18] sm:$0xff]
    %vm52 = vcmask 261120
    %v54 = vsel %vm52, %v37, 0
    %v57 = vsel %vm52, %v38, 0
    %59 = vmatpush.msra.mxu0 0.0
    %60 = vmatpush.msra.mxu0 0.0
    %61 = vmatpush.msra.mxu0 0.0
    %62 = vmatpush.msra.mxu0 0.0
    %63 = vmatpush.msra.mxu0 0.0
    %64 = vmatpush.msra.mxu0 0.0
    %65 = vmatpush.msra.mxu0 0.0
    %66 = vmatpush.msra.mxu0 0.0
    %67 = vmatpush.msra.mxu0 0.0
    %68 = vmatpush.msra.mxu0 0.0
    %69 = vmatpush.msra.mxu0 0.0
    %70 = vmatpush.msra.mxu0 0.0
    %71 = vmatpush.msra.mxu0 %v51
    %72 = vmatpush.msra.mxu0 %v50
    %73 = vmatpush.msra.mxu0 %v49
    %74 = vmatpush.msra.mxu0 %v48
    %75 = vmatmul.f32.gmra.mxu0 %v54
    %v76 = vpop.f32.mrf.mxu0
    %v77 = vadd.f32 0.0, %v76
    %78 = vmatmul.f32.gmra.mxu0 %v57
    %v79 = vpop.f32.mrf.mxu0
    %v80 = vadd.f32 0.0, %v79
    %81 = vdwg.mxu0
    %v82 = vadd.f32 %v46, %v77
    %v83 = vadd.f32 %v47, %v80
    %84 = vst.msk [vmem:[#allocation2] sm:$0xff] %vm52, %v82
    %85 = vst.msk [vmem:[#allocation2 + $0x8] sm:$0xff] %vm52, %v83
    // Predicated region
    $region30: #{tpu_custom_call.1} parent=1 // pred_check
      %p86 = pneg %p39
    $region31: #{tpu_custom_call.1} parent=1 // pred_check_branch
      %88 = sbr.rel (%p86) target = $region33
    $region32: #{tpu_custom_call.1} parent=1 // pred_region
      %vm89 = vcmask 64512
      %90 = vst.msk [vmem:[#allocation3] sm:$0xff] %vm89, 0.0
      %91 = vst.msk [vmem:[#allocation3 + $0x8] sm:$0xff] %vm89, 0.0
    $region33: #{tpu_custom_call.1} parent=1 // pred_fallthru
      _
    %s92 = smul.u32 0, 32
    %s93 = scalar_lea.vmem %s2, %s92
    %v94 = vld [vmem:[%s93] sm:$0xff]
    %v95 = vld [vmem:[%s93 + $0x8] sm:$0xff]
    %v96 = vld [vmem:[%s93 + $0x10] sm:$0xff]
    %v97 = vld [vmem:[%s93 + $0x18] sm:$0xff]
    %v98 = vld [vmem:[#allocation3] sm:$0xff]
    %v99 = vld [vmem:[#allocation3 + $0x8] sm:$0xff]
    %100 = vmatpush.msra.mxu0 0.0
    %101 = vmatpush.msra.mxu0 0.0
    %102 = vmatpush.msra.mxu0 0.0
    %103 = vmatpush.msra.mxu0 0.0
    %104 = vmatpush.msra.mxu0 0.0
    %105 = vmatpush.msra.mxu0 0.0
    %106 = vmatpush.msra.mxu0 0.0
    %107 = vmatpush.msra.mxu0 0.0
    %108 = vmatpush.msra.mxu0 0.0
    %109 = vmatpush.msra.mxu0 0.0
    %110 = vmatpush.msra.mxu0 0.0
    %111 = vmatpush.msra.mxu0 0.0
    %112 = vmatpush.msra.mxu0 %v97
    %113 = vmatpush.msra.mxu0 %v96
    %114 = vmatpush.msra.mxu0 %v95
    %115 = vmatpush.msra.mxu0 %v94
    %116 = vmatmul.f32.gmra.mxu0 %v54
    %v117 = vpop.f32.mrf.mxu0
    %v118 = vadd.f32 0.0, %v117
    %119 = vmatmul.f32.gmra.mxu0 %v57
    %v120 = vpop.f32.mrf.mxu0
    %v121 = vadd.f32 0.0, %v120
    %122 = vdwg.mxu0
    %v123 = vadd.f32 %v98, %v118
    %v124 = vadd.f32 %v99, %v121
    %vm125 = vcmask 64512
    %126 = vst.msk [vmem:[#allocation3] sm:$0xff] %vm125, %v123
    %127 = vst.msk [vmem:[#allocation3 + $0x8] sm:$0xff] %vm125, %v124
    // Predicated region
    $region34: #{tpu_custom_call.1} parent=1 // pred_check
      %p128 = pneg %p39
    $region35: #{tpu_custom_call.1} parent=1 // pred_check_branch
      %130 = sbr.rel (%p128) target = $region37
    $region36: #{tpu_custom_call.1} parent=1 // pred_region
      %v131 = vld [vmem:[#allocation3] sm:$0xff]
      %v132 = vld [vmem:[#allocation3 + $0x8] sm:$0xff]
      %v133 = vld [vmem:[%s3] sm:$0xff]
      %v135 = vsel %vm125, %v131, 0
      %v138 = vsel %vm125, %v132, 0
      %140 = vmatpush.msra.mxu0 0.0
      %141 = vmatpush.msra.mxu0 0.0
      %142 = vmatpush.msra.mxu0 0.0
      %143 = vmatpush.msra.mxu0 0.0
      %144 = vmatpush.msra.mxu0 0.0
      %145 = vmatpush.msra.mxu0 0.0
      %146 = vmatpush.msra.mxu0 0.0
      %147 = vmatpush.msra.mxu0 0.0
      %148 = vmatpush.msra.mxu0 0.0
      %149 = vmatpush.msra.mxu0 0.0
      %150 = vmatpush.msra.mxu0 0.0
      %151 = vmatpush.msra.mxu0 0.0
      %152 = vmatpush.msra.mxu0 0.0
      %153 = vmatpush.msra.mxu0 0.0
      %154 = vmatpush.msra.mxu0 0.0
      %155 = vmatpush.msra.mxu0 %v133
      %156 = vmatmul.f32.gmra.mxu0 %v135
      %v157 = vpop.f32.mrf.mxu0
      %v158 = vadd.f32 0.0, %v157
      %159 = vmatmul.f32.gmra.mxu0 %v138
      %v160 = vpop.f32.mrf.mxu0
      %v161 = vadd.f32 0.0, %v160
      %162 = vdwg.mxu0
      %v163 = vld [vmem:[#allocation2] sm:$0xff]
      %v164 = vld [vmem:[#allocation2 + $0x8] sm:$0xff]
      %v165 = vmul.f32 %v158, 2.0
      %v166 = vmul.f32 %v161, 2.0
      %v167 = vadd.f32 %v163, %v165
      %v168 = vadd.f32 %v164, %v166
      %v169 = vld [vmem:[%s4] sm:$0x1]
      %v171 = vperm.slane %v169, 0
      %v173 = vadd.f32 %v167, %v171
      %v174 = vadd.f32 %v168, %v171
      %175 = vst.msk [vmem:[#allocation7] sm:$0xff] %vm52, %v173
      %176 = vst.msk [vmem:[#allocation7 + $0x8] sm:$0xff] %vm52, %v174
    $region37: #{tpu_custom_call.1} parent=1 // pred_fallthru
      _
    // Predicated region
    $region38: #{tpu_custom_call.1} parent=1 // pred_check
      _
    $region39: #{tpu_custom_call.1} parent=1 // pred_check_branch
      %178 = sbr.rel (0) target = $region41
    $region40: #{tpu_custom_call.1} parent=1 // pred_region
      %180 = vsyncadd [#allocation6], 0
      %s181 = sshll.u32 [#allocation7], 4
      %s182 = int_to_ptr.vmem [resolvable:$true] %s181
      %s183 = sshll.u32 %s5, 4
      %s184 = int_to_ptr.hbm [resolvable:$true] %s183
      %189 = dma.vmem_to_hbm [thread:$0]  %s182, 256, %s184, [#allocation6], 128, 128, 8
    $region41: #{tpu_custom_call.1} parent=1 // pred_fallthru
      _
    // Predicated region
    $region42: #{tpu_custom_call.1} parent=1 // pred_check
      _
    $region43: #{tpu_custom_call.1} parent=1 // pred_check_branch
      %191 = sbr.rel (0) target = $region45
    $region44: #{tpu_custom_call.1} parent=1 // pred_region
      %193 = dma.done [#allocation6], 256
    $region45: #{tpu_custom_call.1} parent=1 // pred_fallthru
      _
    %194 = vsyncpa [#allocation5], 1
    %195 = vsyncpa [#allocation6], 1

</llo_original>
